<compile_context>
chip_gen: v6e
topology: v6e:2x2x1
jax: 0.10.0
libtpu: 0.0.40
codegen_flags: <defaults>
</compile_context>

<pallas_src>
import jax
import jax.numpy as jnp
from jax.experimental import pallas as pl
from jax.experimental.pallas import tpu as pltpu


# ------------------------------ helpers --------------------------------------
def _round_up(x, m):
    return (x + m - 1) // m * m


def _vmem_limit_bytes():
    """~75% of the physical per-core VMEM (generation-aware)."""
    cap = None
    try:
        info = pltpu.get_tpu_info()
        for name in ("vmem_capacity_bytes", "vmem_bytes", "vmem_size_bytes"):
            cap = getattr(info, name, None)
            if cap:
                break
    except Exception:
        cap = None
    if not cap:
        cap = 64 << 20  # conservative fallback = v7x per-core VMEM
    return int(cap) * 3 // 4


def _bspec(shape, index_map, buffers=None):
    """BlockSpec helper; requests an explicit buffer count when supported."""
    if buffers is None:
        return pl.BlockSpec(shape, index_map)
    try:
        return pl.BlockSpec(shape, index_map, pipeline_mode=pl.Buffered(buffers))
    except (TypeError, AttributeError):
        return pl.BlockSpec(shape, index_map)


# ----------------------------- Pallas kernels --------------------------------
def _h_kernel(x_ref, w1_ref, b1_ref, h_ref):
    """h[:, j-tile] = tanh(x @ W1[:, j-tile] + b1[j-tile])   (bf16 output)."""
    acc = jnp.dot(x_ref[...], w1_ref[...], preferred_element_type=jnp.float32)
    h_ref[...] = jnp.tanh(acc + b1_ref[...]).astype(h_ref.dtype)


def _w2_kernel(h_ref, w2_ref, b2_ref, o_ref):
    """out[i-tile, j-tile] = h[i-tile] @ W2[:, j-tile] + b2[j-tile]."""
    acc = jnp.dot(h_ref[...], w2_ref[...], preferred_element_type=jnp.float32)
    o_ref[...] = (acc + b2_ref[...]).astype(o_ref.dtype)


# ------------------------------ MLP wrapper -----------------------------------
def prefix_mlp(x, w1, b1, w2, b2):
    """x: (M, token_dim) -> (M, num_layers*2*token_dim) f32, via Pallas."""
    M, token_dim = x.shape
    hidden = w1.shape[1]
    out_dim = w2.shape[1]
    vmem_limit = _vmem_limit_bytes()

    # ---- dtype & padding (bf16 sublane packing: pad M to a multiple of 16) --
    m_pad = _round_up(max(M, 16), 16)
    if m_pad != M:
        x = jnp.pad(x, ((0, m_pad - M), (0, 0)))
    x = x.astype(jnp.bfloat16)
    w1 = w1.astype(jnp.bfloat16)
    w2 = w2.astype(jnp.bfloat16)
    b1 = b1.reshape(1, hidden).astype(jnp.float32)
    b2 = b2.reshape(1, out_dim).astype(jnp.float32)

    # Lane-dense out_dim: pad to a multiple of 128 so tn tiles are unmasked.
    n_pad = _round_up(out_dim, 128)
    if n_pad != out_dim:
        w2 = jnp.pad(w2, ((0, 0), (0, n_pad - out_dim)))
        b2 = jnp.pad(b2, ((0, 0), (0, n_pad - out_dim)))

    # ========================= Stage 1: h = tanh(x@W1+b1) ====================
    if hidden % 128 == 0 and hidden > 128:
        # per-tn-column bytes: W1 double-buffer + h (bf16, dbuf) + b1
        per_th = 2 * token_dim * 2 + 2 * m_pad * 2 + 2 * 4
        budget = max(vmem_limit - m_pad * token_dim * 2 - (2 << 20), 0)
        th = min(hidden, max(128, (budget // per_th) // 128 * 128))
    else:
        th = hidden  # full-extent block (small / non-128 hidden)

    h = pl.pallas_call(
        _h_kernel,
        out_shape=jax.ShapeDtypeStruct((m_pad, hidden), jnp.bfloat16),
        grid_spec=pltpu.PrefetchScalarGridSpec(
            num_scalar_prefetch=0,
            grid=(pl.cdiv(hidden, th),),
            in_specs=[
                _bspec((m_pad, token_dim), lambda j: (0, 0), buffers=1),  # x (call-constant)
                _bspec((token_dim, th), lambda j: (0, j)),                # W1 streamed
                _bspec((1, th), lambda j: (0, j)),                        # b1
            ],
            out_specs=pl.BlockSpec((m_pad, th), lambda j: (0, j)),
        ),
        compiler_params=pltpu.CompilerParams(
            dimension_semantics=("parallel",),
            vmem_limit_bytes=vmem_limit),
        cost_estimate=pl.CostEstimate(
            flops=2 * m_pad * token_dim * hidden,
            transcendentals=m_pad * hidden,
            bytes_accessed=(m_pad * token_dim * 2 + token_dim * hidden * 2
                            + hidden * 4 + m_pad * hidden * 2)),
    )(x, w1, b1)

    # ========================= Stage 2: out = h@W2+b2 ========================
    # One M tile whenever the h slab fits a third of the VMEM budget -> W2 is
    # streamed from HBM exactly once.
    h_budget = vmem_limit // 3
    if m_pad * hidden * 2 <= h_budget:
        tm = m_pad
    else:
        tm = max(16, (h_budget // (hidden * 2)) // 16 * 16)
    num_m = pl.cdiv(m_pad, tm)
    # TODO(synk): when num_m > 1 (huge batch) h re-streams once per N tile;
    # W2 still streams exactly once because M is the inner grid axis.

    h_buffers = 1 if num_m == 1 else 2
    resident = tm * hidden * 2 * h_buffers + (2 << 20)        # h slab + slack
    per_tn = 2 * hidden * 2 + 2 * tm * 4 + 2 * 4              # W2 dbuf + f32 out dbuf + b2
    tn = min(n_pad, max(128, (max(vmem_limit - resident, 0) // per_tn) // 128 * 128))
    num_n = pl.cdiv(n_pad, tn)

    out = pl.pallas_call(
        _w2_kernel,
        out_shape=jax.ShapeDtypeStruct((m_pad, n_pad), jnp.float32),
        grid_spec=pltpu.PrefetchScalarGridSpec(
            num_scalar_prefetch=0,
            # N outer (megacore-sharded on v7x), M inner (W2 read once).
            grid=(num_n, num_m),
            in_specs=[
                _bspec((tm, hidden), lambda j, i: (i, 0), buffers=h_buffers),  # h
                _bspec((hidden, tn), lambda j, i: (0, j)),                      # W2 streamed
                _bspec((1, tn), lambda j, i: (0, j)),                           # b2
            ],
            out_specs=pl.BlockSpec((tm, tn), lambda j, i: (i, j)),
        ),
        compiler_params=pltpu.CompilerParams(
            dimension_semantics=("parallel", "parallel"),
            vmem_limit_bytes=vmem_limit),
        cost_estimate=pl.CostEstimate(
            flops=2 * m_pad * hidden * n_pad,
            transcendentals=0,
            bytes_accessed=(m_pad * hidden * 2 * num_n + hidden * n_pad * 2
                            + n_pad * 4 + m_pad * n_pad * 4)),
    )(h, w2, b2)

    return out[:M, :out_dim]


# ----------------------------- Module wrapper ---------------------------------
class PrefixEncoderPallas:
    """JAX/Pallas re-implementation of the PyTorch PrefixEncoder forward."""

    def __init__(self, *, prefix_projection, token_dim, num_layers,
                 encoder_hidden_size, num_virtual_tokens, key):
        self.prefix_projection = prefix_projection
        out_dim = num_layers * 2 * token_dim
        k0, k1, k2, k3, k4 = jax.random.split(key, 5)
        if prefix_projection:
            self.embeddings = jax.random.normal(
                k0, (num_virtual_tokens, token_dim), jnp.float32) * 0.02
            # Weights stored once in bf16 (kernel-native dtype); biases in f32.
            self.w1 = (jax.random.normal(
                k1, (token_dim, encoder_hidden_size), jnp.float32) * 0.05
                       ).astype(jnp.bfloat16)
            self.b1 = jax.random.normal(
                k2, (1, encoder_hidden_size), jnp.float32) * 0.01
            self.w2 = (jax.random.normal(
                k3, (encoder_hidden_size, out_dim), jnp.float32) * 0.05
                       ).astype(jnp.bfloat16)
            self.b2 = jax.random.normal(k4, (1, out_dim), jnp.float32) * 0.01
        else:
            self.embeddings = jax.random.normal(
                k0, (num_virtual_tokens, out_dim), jnp.float32) * 0.02

    def __call__(self, prefix):
        # prefix: (batch, num_virtual_tokens) int32 indices
        if self.prefix_projection:
            # Embedding gather is glue (KiB scale); the MLP is the hot path.
            prefix_tokens = jnp.take(self.embeddings, prefix, axis=0)  # (B, T, D)
            B, T, D = prefix_tokens.shape
            flat = prefix_tokens.reshape(B * T, D)
            out = prefix_mlp(flat, self.w1, self.b1, self.w2, self.b2)
            return out.reshape(B, T, -1)
        else:
            # Pure gather branch has no matmul hot path; plain take.
            return jnp.take(self.embeddings, prefix, axis=0)

    def reference(self, prefix):
        """Pure-JAX reference using the same bf16 operand rounding as the kernel."""
        if self.prefix_projection:
            t = jnp.take(self.embeddings, prefix, axis=0)
            t = t.astype(jnp.bfloat16).astype(jnp.float32)
            h = jnp.tanh(t @ self.w1.astype(jnp.float32) + self.b1[0])
            h = h.astype(jnp.bfloat16).astype(jnp.float32)
            return h @ self.w2.astype(jnp.float32) + self.b2[0]
        return jnp.take(self.embeddings, prefix, axis=0)


# --------------------------------- main ----------------------------------------
if __name__ == "__main__":
    batch = 2
    num_virtual_tokens = 8
    token_dim = 32
    num_layers = 2
    encoder_hidden_size = 64

    key = jax.random.PRNGKey(0)
    k_params, k_other = jax.random.split(key)

    enc = PrefixEncoderPallas(
        prefix_projection=True,
        token_dim=token_dim,
        num_layers=num_layers,
        encoder_hidden_size=encoder_hidden_size,
        num_virtual_tokens=num_virtual_tokens,
        key=k_params,
    )

    # prefix indices: each row is the arange of virtual tokens (typical usage).
    prefix = jnp.tile(jnp.arange(num_virtual_tokens, dtype=jnp.int32)[None, :],
                      (batch, 1))

    out = enc(prefix)
    out = jax.block_until_ready(out)

    ref = enc.reference(prefix)
    assert out.shape == (batch, num_virtual_tokens, num_layers * 2 * token_dim)
    # bf16 operands -> loosened tolerance vs f32-emulated reference.
    assert jnp.allclose(out, ref, atol=1e-2, rtol=1e-2)

    # Also exercise the no-projection (pure embedding lookup) branch.
    enc2 = PrefixEncoderPallas(
        prefix_projection=False,
        token_dim=token_dim,
        num_layers=num_layers,
        encoder_hidden_size=encoder_hidden_size,
        num_virtual_tokens=num_virtual_tokens,
        key=k_other,
    )
    out2 = jax.block_until_ready(enc2(prefix))
    assert out2.shape == (batch, num_virtual_tokens, num_layers * 2 * token_dim)
    assert jnp.allclose(out2, enc2.reference(prefix))

    print("KERNEL_OK")
</pallas_src>

<mosaic_0001>
module attributes {stable_mosaic.version = 11 : i64} {
  func.func @_h_kernel(%arg0: i32, %arg1: memref<16x32xbf16, #tpu.memory_space<vmem>>, %arg2: memref<32x64xbf16, #tpu.memory_space<vmem>>, %arg3: memref<1x64xf32, #tpu.memory_space<vmem>>, %arg4: memref<16x64xbf16, #tpu.memory_space<vmem>>) attributes {dimension_semantics = [#tpu.dimension_semantics<parallel>], iteration_bounds = array<i64: 1>, scalar_prefetch = 0 : i64, scratch_operands = 0 : i64, tpu.core_type = #tpu.core_type<tc>, window_params = [{pipeline_mode = #tpu.pipeline_mode<synchronous>, transform_indices = @transform_0, window_bounds = array<i64: 16, 32>}, {transform_indices = @transform_1, window_bounds = array<i64: 32, 64>}, {transform_indices = @transform_2, window_bounds = array<i64: 1, 64>}, {transform_indices = @transform_3, window_bounds = array<i64: 16, 64>}]} {
    %c0 = arith.constant 0 : index
    %c0_0 = arith.constant 0 : index
    %0 = vector.load %arg1[%c0, %c0_0] : memref<16x32xbf16, #tpu.memory_space<vmem>>, vector<16x32xbf16>
    %c0_1 = arith.constant 0 : index
    %c0_2 = arith.constant 0 : index
    %1 = vector.load %arg2[%c0_1, %c0_2] : memref<32x64xbf16, #tpu.memory_space<vmem>>, vector<32x64xbf16>
    %cst = arith.constant dense<0.000000e+00> : vector<16x64xf32>
    %2 = tpu.matmul %0, %1, %cst {dimension_numbers = #tpu.dot_dimension_numbers<[1], [0], [0], [1], [0, 0, 1, 1], [], []>} : vector<16x32xbf16>, vector<32x64xbf16>, vector<16x64xf32> -> vector<16x64xf32>
    %c0_3 = arith.constant 0 : index
    %c0_4 = arith.constant 0 : index
    %3 = vector.load %arg3[%c0_3, %c0_4] : memref<1x64xf32, #tpu.memory_space<vmem>>, vector<1x64xf32>
    %4 = vector.broadcast %3 : vector<1x64xf32> to vector<16x64xf32>
    %5 = arith.addf %2, %4 : vector<16x64xf32>
    %6 = math.tanh %5 : vector<16x64xf32>
    %7 = arith.truncf %6 : vector<16x64xf32> to vector<16x64xbf16>
    %c0_5 = arith.constant 0 : index
    %c0_6 = arith.constant 0 : index
    %8 = vector.load %arg4[%c0_5, %c0_6] : memref<16x64xbf16, #tpu.memory_space<vmem>>, vector<16x64xbf16>
    tpu.vector_store %arg4[%c0_5, %c0_6], %7 {strides = array<i32>} : memref<16x64xbf16, #tpu.memory_space<vmem>>, vector<16x64xbf16>,
    return
  }
  func.func @transform_0(%arg0: i32) -> (i32, i32) {
    %c0_i32 = arith.constant 0 : i32
    %c0_i32_0 = arith.constant 0 : i32
    %c0_i32_1 = arith.constant 0 : i32
    return %c0_i32, %c0_i32_0 : i32, i32
  }
  func.func @transform_1(%arg0: i32) -> (i32, i32) {
    %c0_i32 = arith.constant 0 : i32
    %c0_i32_0 = arith.constant 0 : i32
    return %c0_i32, %arg0 : i32, i32
  }
  func.func @transform_2(%arg0: i32) -> (i32, i32) {
    %c0_i32 = arith.constant 0 : i32
    %c0_i32_0 = arith.constant 0 : i32
    return %c0_i32, %arg0 : i32, i32
  }
  func.func @transform_3(%arg0: i32) -> (i32, i32) {
    %c0_i32 = arith.constant 0 : i32
    %c0_i32_0 = arith.constant 0 : i32
    return %c0_i32, %arg0 : i32, i32
  }
}

</mosaic_0001>

<llo_original>
// kernel: tpu_custom_call.1
$region0: #{tpu_custom_call.1}
  #allocation0 [shape = 'u32[]', space=smem, size = 0x4, offset = 0x4, fixed_abs, tag = 'smem constant byte address 0x4 - core index']
  #allocation1 [shape = 'u32[144,128]{1,0:T(1,128)}', space=vmem, size = 0x12000, scoped, tag = 'internal scratch']
  %s0 = inlined_call_operand.hbm [shape: bf16[16,32], index: 0, kind: input, shape index: {}]
  %s1 = inlined_call_operand.hbm [shape: bf16[32,64], index: 1, kind: input, shape index: {}]
  %s2 = inlined_call_operand.vmem [shape: f32[1,64], index: 2, kind: input, shape index: {}]
  %s3 = inlined_call_operand.hbm [shape: bf16[16,64], index: 3, kind: output, shape index: {}]
  %s4 = sld [smem:[#allocation0]]
  $region30: #{tpu_custom_call.1} parent=0
    _
  %s6 = ssub.s32 1, %s4
  %s7 = scalar_select 0, %s6, %s4
  $region1: #{tpu_custom_call.1} parent=0
    #allocation2 [shape = 'u8[4096]{0}', space=vmem, size = 0x1000, scoped, tag = 'input window, operand 0, single buffered']
    #allocation3 [shape = 's32[1]{0}', space=sflag, size = 0x4, scoped, tag = 'scoped memory for tpu_custom_call.1']
    #allocation4 [shape = 's32[1]{0}', space=sflag, size = 0x4, scoped, tag = 'scoped memory for tpu_custom_call.1']
    #allocation5 [shape = 'u8[8192]{0}', space=vmem, size = 0x2000, scoped, tag = 'input window, operand 1, single buffered']
    #allocation6 [shape = 's32[1]{0}', space=sflag, size = 0x4, scoped, tag = 'scoped memory for tpu_custom_call.1']
    #allocation7 [shape = 'u8[4096]{0}', space=vmem, size = 0x1000, scoped, tag = 'output window, operand 0, single buffered']
    %8 = vsyncpa [#allocation3], 0
    %9 = vsyncpa [#allocation6], 0
    %10 = vsyncpa [#allocation4], 0
    // Predicated region
    $region2: #{tpu_custom_call.1} parent=1 // pred_check
      _
    $region3: #{tpu_custom_call.1} parent=1 // pred_check_branch
      %12 = sbr.rel (0) target = $region5
    $region4: #{tpu_custom_call.1} parent=1 // pred_region
      %s14 = ssub.s32 128, 128
      %15 = vsyncadd [#allocation3], %s14
      %s16 = sshll.u32 [#allocation2], 4
      %s17 = int_to_ptr.vmem [resolvable:$true] %s16
      %22 = dma.hbm_to_vmem [thread:$0]  %s0, 128, %s17, [#allocation3], 64, 64, 4
    $region5: #{tpu_custom_call.1} parent=1 // pred_fallthru
      _
    // Predicated region
    $region6: #{tpu_custom_call.1} parent=1 // pred_check
      _
    $region7: #{tpu_custom_call.1} parent=1 // pred_check_branch
      %24 = sbr.rel (0) target = $region9
    $region8: #{tpu_custom_call.1} parent=1 // pred_region
      %s26 = ssub.s32 256, 256
      %27 = vsyncadd [#allocation6], %s26
      %s28 = sshll.u32 [#allocation5], 4
      %s29 = int_to_ptr.vmem [resolvable:$true] %s28
      %34 = dma.hbm_to_vmem [thread:$0]  %s1, 256, %s29, [#allocation6], 64, 64, 4
    $region9: #{tpu_custom_call.1} parent=1 // pred_fallthru
      _
    // Predicated region
    $region10: #{tpu_custom_call.1} parent=1 // pred_check
      _
    $region11: #{tpu_custom_call.1} parent=1 // pred_check_branch
      %36 = sbr.rel (0) target = $region13
    $region12: #{tpu_custom_call.1} parent=1 // pred_region
      _
    $region13: #{tpu_custom_call.1} parent=1 // pred_fallthru
      _
    // Predicated region
    $region14: #{tpu_custom_call.1} parent=1 // pred_check
      _
    $region15: #{tpu_custom_call.1} parent=1 // pred_check_branch
      %38 = sbr.rel (0) target = $region17
    $region16: #{tpu_custom_call.1} parent=1 // pred_region
      %39 = dma.done [#allocation3], 128
    $region17: #{tpu_custom_call.1} parent=1 // pred_fallthru
      _
    // Predicated region
    $region18: #{tpu_custom_call.1} parent=1 // pred_check
      _
    $region19: #{tpu_custom_call.1} parent=1 // pred_check_branch
      %41 = sbr.rel (0) target = $region21
    $region20: #{tpu_custom_call.1} parent=1 // pred_region
      %42 = dma.done [#allocation6], 256
    $region21: #{tpu_custom_call.1} parent=1 // pred_fallthru
      _
    %v44 = vld [vmem:[#allocation2] sm:$0xf]
    %v45 = vld [vmem:[#allocation2 + $0x4] sm:$0xf]
    %v46 = vld [vmem:[#allocation5] sm:$0xf]
    %v47 = vld [vmem:[#allocation5 + $0x4] sm:$0xf]
    %v48 = vld [vmem:[#allocation5 + $0x8] sm:$0xf]
    %v49 = vld [vmem:[#allocation5 + $0xc] sm:$0xf]
    %v50 = vld [vmem:[%s2] sm:$0x1]
    %v52 = vlaneseq
    %v53 = vshrl.u32 %v52, 7
    %v54 = vsub.s32 0, %v53
    %v55 = vrot.slane %v50, %v54
    %v59 = vunpack.c.l.b16 %v44
    %v60 = vunpack.c.l.b16 %v45
    %v61 = vpack.c.b16 %v60, %v59
    %v66 = vunpack.c.l.b16 %v46
    %v67 = vunpack.c.l.b16 %v47
    %v68 = vunpack.c.l.b16 %v48
    %v69 = vunpack.c.l.b16 %v49
    %v70 = vpack.c.b16 %v67, %v66
    %v71 = vpack.c.b16 %v69, %v68
    %vm74 = vcmask 261120
    %v76 = vsel %vm74, %v61, 0
    %78 = vmatprep.subr.bf16.mxu0 0
    %79 = vmatpush1.bf16.msra.mxu0 0
    %80 = vmatprep.subr.bf16.mxu0 0
    %81 = vmatpush1.bf16.msra.mxu0 0
    %82 = vmatprep.subr.bf16.mxu0 0
    %83 = vmatpush1.bf16.msra.mxu0 0
    %84 = vmatprep.subr.bf16.mxu0 0
    %85 = vmatpush1.bf16.msra.mxu0 0
    %86 = vmatprep.subr.bf16.mxu0 0
    %87 = vmatpush1.bf16.msra.mxu0 0
    %88 = vmatprep.subr.bf16.mxu0 0
    %89 = vmatpush1.bf16.msra.mxu0 0
    %90 = vmatprep.subr.bf16.mxu0 0
    %91 = vmatpush1.bf16.msra.mxu0 %v71
    %92 = vmatprep.subr.bf16.mxu0 0
    %93 = vmatpush1.bf16.msra.mxu0 %v70
    %94 = vmatprep.subr.bf16.mxu0 0
    %95 = vmatpush2.bf16.msra.mxu0 0
    %96 = vmatprep.subr.bf16.mxu0 0
    %97 = vmatpush2.bf16.msra.mxu0 0
    %98 = vmatprep.subr.bf16.mxu0 0
    %99 = vmatpush2.bf16.msra.mxu0 0
    %100 = vmatprep.subr.bf16.mxu0 0
    %101 = vmatpush2.bf16.msra.mxu0 0
    %102 = vmatprep.subr.bf16.mxu0 0
    %103 = vmatpush2.bf16.msra.mxu0 0
    %104 = vmatprep.subr.bf16.mxu0 0
    %105 = vmatpush2.bf16.msra.mxu0 0
    %106 = vmatprep.subr.bf16.mxu0 0
    %107 = vmatpush2.bf16.msra.mxu0 0
    %108 = vmatprep.subr.bf16.mxu0 0
    %109 = vmatpush2.bf16.msra.mxu0 0
    %110 = vmatprep.mubr.bf16.mxu0 0
    %111 = vmatmul.mubr.bf16.gmra.mxu0 %v76
    %v112 = vpop.f32.mrf.mxu0
    %v113 = vadd.f32 %v55, %v112
    %v114 = vpop.f32.mrf.mxu0
    %v115 = vpop.f32.mrf.mxu0
    %v116 = vadd.f32 %v55, %v115
    %v117 = vpop.f32.mrf.mxu0
    %118 = vdwg.mxu0
    %v119 = vtanh.pop %v113
    %v120 = vtanh.pop %v116
    %v121 = vpack.c.bf16 %v120, %v119
    %v123 = vunpack.c.l.b16 %v121
    %v124 = vunpack.c.h.b16 %v121
    %v125 = vpack.c.b16 %v123, %v123
    %v126 = vpack.c.b16 %v124, %v124
    %vm129 = vcmask 519168
    %130 = vst.msk [vmem:[#allocation7] sm:$0xf] %vm129, %v125
    %131 = vst.msk [vmem:[#allocation7 + $0x4] sm:$0xf] %vm129, %v126
    // Predicated region
    $region22: #{tpu_custom_call.1} parent=1 // pred_check
      _
    $region23: #{tpu_custom_call.1} parent=1 // pred_check_branch
      %133 = sbr.rel (0) target = $region25
    $region24: #{tpu_custom_call.1} parent=1 // pred_region
      %s135 = ssub.s32 128, 128
      %136 = vsyncadd [#allocation4], %s135
      %s137 = sshll.u32 [#allocation7], 4
      %s138 = int_to_ptr.vmem [resolvable:$true] %s137
      %143 = dma.vmem_to_hbm [thread:$0]  %s138, 128, %s3, [#allocation4], 64, 64, 4
    $region25: #{tpu_custom_call.1} parent=1 // pred_fallthru
      _
    // Predicated region
    $region26: #{tpu_custom_call.1} parent=1 // pred_check
      _
    $region27: #{tpu_custom_call.1} parent=1 // pred_check_branch
      %145 = sbr.rel (0) target = $region29
    $region28: #{tpu_custom_call.1} parent=1 // pred_region
      %146 = dma.done [#allocation4], 128
    $region29: #{tpu_custom_call.1} parent=1 // pred_fallthru
      _
    %147 = vsyncpa [#allocation3], 1
    %148 = vsyncpa [#allocation6], 1
    %149 = vsyncpa [#allocation4], 1

</llo_original>
